<compile_context>
chip_gen: v5e
topology: v5e:2x2
jax: 0.10.0
libtpu: 0.0.40
codegen_flags: <defaults>
</compile_context>

<pallas_src>
import jax
import jax.numpy as jnp
from jax import lax
from jax.experimental import pallas as pl
from jax.experimental.pallas import tpu as pltpu


def _round_up(x, m):
    return (x + m - 1) // m * m


def _embed_gather_kernel(ids_ref, w_ref, o_ref):
    # ids_ref: (n_pad,) int32 token ids in SMEM (scalar prefetch)
    # w_ref:   (V, D) embedding table, VMEM-resident across all grid steps
    # o_ref:   (T, D) output tile for this grid step
    t_per_step = o_ref.shape[0]
    base = pl.program_id(0) * t_per_step

    def body(t, carry):
        row = ids_ref[base + t]                       # SMEM scalar read
        o_ref[pl.ds(t, 1), :] = w_ref[pl.ds(row, 1), :]   # VMEM row copy
        return carry

    lax.fori_loop(0, t_per_step, body, 0)


def my_embedding(ids, weight, *, tokens_per_step=512):
    """Pallas embedding lookup.

    ids:    (B, S) int token indices
    weight: (V, D) float32 embedding table
    returns (B, S, D) float32
    """
    B, S = ids.shape
    V, D = weight.shape
    n = B * S
    itemsize = jnp.dtype(weight.dtype).itemsize

    # Clamp ids (PyTorch would raise on OOB; here we make the gather safe).
    flat_ids = jnp.clip(ids.reshape(n).astype(jnp.int32), 0, V - 1)

    # Tokens per grid step: multiple of 8 for sublane-dense output tiles.
    T = _round_up(min(tokens_per_step, n), 8)
    n_pad = _round_up(n, T)
    if n_pad != n:
        flat_ids = jnp.concatenate(
            [flat_ids, jnp.zeros((n_pad - n,), jnp.int32)])

    grid = (n_pad // T,)

    table_bytes = V * D * itemsize
    out_tile_bytes = T * D * itemsize
    vmem_needed = 2 * table_bytes + 2 * out_tile_bytes + (1 << 20)
    # TODO(synk): for vocab tables too large for VMEM (>~48 MiB on v7x,
    # >~100 MiB on v5e/v6e) switch to a manual multi-slot DMA gather with the
    # table left in HBM (memory_space=pl.ANY) and 4-8 in-flight row copies.
    assert vmem_needed <= (100 << 20), (
        "embedding table too large for the VMEM-resident gather path")

    grid_spec = pltpu.PrefetchScalarGridSpec(
        num_scalar_prefetch=1,                      # flat_ids -> SMEM
        grid=grid,
        in_specs=[
            # Full table, same block every step -> loaded to VMEM once.
            pl.BlockSpec((V, D), lambda i, ids_ref: (0, 0)),
        ],
        out_specs=pl.BlockSpec((T, D), lambda i, ids_ref: (i, 0)),
    )

    cost = pl.CostEstimate(
        flops=0,
        transcendentals=0,
        bytes_accessed=table_bytes + 2 * n_pad * D * itemsize,
    )

    out_flat = pl.pallas_call(
        _embed_gather_kernel,
        grid_spec=grid_spec,
        out_shape=jax.ShapeDtypeStruct((n_pad, D), weight.dtype),
        compiler_params=pltpu.CompilerParams(
            dimension_semantics=("parallel",),      # independent tiles (v7x 2-TC)
            vmem_limit_bytes=int(min(max(vmem_needed, 32 << 20), 100 << 20)),
        ),
        cost_estimate=cost,
    )(flat_ids, weight)

    return out_flat[:n].reshape(B, S, D)


if __name__ == "__main__":
    key = jax.random.PRNGKey(0)
    k_w, k_ids = jax.random.split(key)

    # Small shapes consistent with the module: fix_length=20, emsize=256.
    B, S, V, D = 4, 20, 96, 256

    # init_weights(): embedding.weight ~ uniform(-0.5, 0.5).
    weight = jax.random.uniform(k_w, (V, D), dtype=jnp.float32,
                                minval=-0.5, maxval=0.5)
    ids = jax.random.randint(k_ids, (B, S), 0, V, dtype=jnp.int32)

    out = jax.block_until_ready(my_embedding(ids, weight))

    # Reference semantics: weight[ids] (what the PyTorch loops compute).
    ref = jnp.take(weight, ids, axis=0)
    assert out.shape == (B, S, D), out.shape
    assert out.dtype == jnp.float32, out.dtype
    assert jnp.allclose(out, ref), "Pallas gather mismatch vs reference"

    print("KERNEL_OK")
</pallas_src>

<mosaic_0001>
module attributes {stable_mosaic.version = 11 : i64} {
  func.func @_embed_gather_kernel(%arg0: i32, %arg1: memref<80xi32, #tpu.memory_space<smem>>, %arg2: memref<96x256xf32, #tpu.memory_space<vmem>>, %arg3: memref<80x256xf32, #tpu.memory_space<vmem>>) attributes {dimension_semantics = [#tpu.dimension_semantics<parallel>], iteration_bounds = array<i64: 1>, scalar_prefetch = 1 : i64, scratch_operands = 0 : i64, tpu.core_type = #tpu.core_type<tc>, window_params = [{pipeline_mode = #tpu.pipeline_mode<synchronous>, transform_indices = @transform_0, window_bounds = array<i64: 96, 256>}, {transform_indices = @transform_1, window_bounds = array<i64: 80, 256>}]} {
    %c80_i32 = arith.constant 80 : i32
    %0 = arith.muli %arg0, %c80_i32 : i32
    %c0_i32 = arith.constant 0 : i32
    %c80_i32_0 = arith.constant 80 : i32
    %1 = arith.addi %c0_i32, %c80_i32_0 : i32
    %c1_i32 = arith.constant 1 : i32
    scf.for %arg4 = %c0_i32 to %1 step %c1_i32  : i32 {
      %2 = arith.addi %0, %arg4 : i32
      %3 = arith.index_cast %2 : i32 to index
      %4 = memref.load %arg1[%3] : memref<80xi32, #tpu.memory_space<smem>>
      %5 = arith.index_cast %4 : i32 to index
      %c0 = arith.constant 0 : index
      %6 = vector.load %arg2[%5, %c0] : memref<96x256xf32, #tpu.memory_space<vmem>>, vector<1x256xf32>
      %7 = arith.index_cast %arg4 : i32 to index
      %c0_2 = arith.constant 0 : index
      %8 = vector.load %arg3[%7, %c0_2] : memref<80x256xf32, #tpu.memory_space<vmem>>, vector<1x256xf32>
      tpu.vector_store %arg3[%7, %c0_2], %6 {strides = array<i32>} : memref<80x256xf32, #tpu.memory_space<vmem>>, vector<1x256xf32>,
    }
    %c80_i32_1 = arith.constant 80 : i32
    return
  }
  func.func @transform_0(%arg0: i32, %arg1: memref<80xi32, #tpu.memory_space<smem>>) -> (i32, i32) {
    %c0_i32 = arith.constant 0 : i32
    %c0_i32_0 = arith.constant 0 : i32
    %c0_i32_1 = arith.constant 0 : i32
    return %c0_i32, %c0_i32_0 : i32, i32
  }
  func.func @transform_1(%arg0: i32, %arg1: memref<80xi32, #tpu.memory_space<smem>>) -> (i32, i32) {
    %c0_i32 = arith.constant 0 : i32
    %c0_i32_0 = arith.constant 0 : i32
    return %arg0, %c0_i32 : i32, i32
  }
}

</mosaic_0001>

<llo_original>
// kernel: tpu_custom_call.1
$region0: #{tpu_custom_call.1}
  #allocation0 [shape = 'u32[]', space=smem, size = 0x4, offset = 0x4, fixed_abs, tag = 'smem constant byte address 0x4 - core index']
  #allocation1 [shape = 'u32[72,128]{1,0:T(1,128)}', space=vmem, size = 0x9000, scoped, tag = 'internal scratch']
  #allocation2 [shape = 's32[1]{0}', space=sflag, size = 0x4, scoped, tag = 'scoped memory for tpu_custom_call.1']
  #allocation3 [shape = 'u8[512]{0}', space=smem, size = 0x200, scoped, tag = 'prefetched SMEM operand 0']
  %s0 = inlined_call_operand.hbm [shape: s32[80], index: 0, kind: input, shape index: {}]
  %s1 = inlined_call_operand.hbm [shape: f32[96,256], index: 1, kind: input, shape index: {}]
  %s2 = inlined_call_operand.hbm [shape: f32[80,256], index: 2, kind: output, shape index: {}]
  %s3 = sld [smem:[#allocation0]]
  $region25: #{tpu_custom_call.1} parent=0
    _
  %s5 = ssub.s32 1, %s3
  %s6 = scalar_select 0, %s5, %s3
  %s8 = sshll.u32 %s0, 4
  %s9 = int_to_ptr.hbm [resolvable:$true] %s8
  %11 = dma.hbm_to_smem %s9, 16, [#allocation3], [#allocation2]
  %13 = dma.done [#allocation2], 16
  %14 = sfence
  $region1: #{tpu_custom_call.1} parent=0
    #allocation4 [shape = 'u8[98304]{0}', space=vmem, size = 0x18000, scoped, tag = 'input window, operand 1, single buffered']
    #allocation5 [shape = 's32[1]{0}', space=sflag, size = 0x4, scoped, tag = 'scoped memory for tpu_custom_call.1']
    #allocation6 [shape = 's32[1]{0}', space=sflag, size = 0x4, scoped, tag = 'scoped memory for tpu_custom_call.1']
    #allocation7 [shape = 'u8[81920]{0}', space=vmem, size = 0x14000, scoped, tag = 'output window, operand 0, single buffered']
    %15 = vsyncpa [#allocation5], 0
    %16 = vsyncpa [#allocation6], 0
    // Predicated region
    $region2: #{tpu_custom_call.1} parent=1 // pred_check
      _
    $region3: #{tpu_custom_call.1} parent=1 // pred_check_branch
      %18 = sbr.rel (0) target = $region5
    $region4: #{tpu_custom_call.1} parent=1 // pred_region
      %20 = vsyncadd [#allocation5], 0
      %s21 = sshll.u32 %s1, 4
      %s22 = int_to_ptr.hbm [resolvable:$true] %s21
      %s23 = sshll.u32 [#allocation4], 4
      %s24 = int_to_ptr.vmem [resolvable:$true] %s23
      %29 = dma.hbm_to_vmem [thread:$0]  %s22, 3072, %s24, [#allocation5], 256, 256, 16
    $region5: #{tpu_custom_call.1} parent=1 // pred_fallthru
      _
    // Predicated region
    $region6: #{tpu_custom_call.1} parent=1 // pred_check
      _
    $region7: #{tpu_custom_call.1} parent=1 // pred_check_branch
      %31 = sbr.rel (0) target = $region9
    $region8: #{tpu_custom_call.1} parent=1 // pred_region
      %33 = dma.done [#allocation5], 3072
    $region9: #{tpu_custom_call.1} parent=1 // pred_fallthru
      _
    %s34 = smul.u32 0, 80
    loop: start=0, step=1, limit=80
    $region10: #{tpu_custom_call.1} parent=1 // loop_pre_header
      _
    $region11: #{tpu_custom_call.1} parent=1 // loop_header
      %s36 = sphi 0, %s40
      %p37 = scmp.ge.s32.totalorder %s36, 80
    $region12: #{tpu_custom_call.1} parent=1 // loop_header_branch
      %39 = sbr.rel (%p37) target = $region16
    $region13: #{tpu_custom_call.1} parent=1 // loop_body
      %s41 = sadd.s32 %s34, %s36
      %s42 = sld [smem:[#allocation3 + %s41]]
      %s43 = sshra.s32 %s42, 3
      %s44 = sand.u32 %s42, 7
      %s45 = sshra.s32 %s42, 3
      %s46 = sand.u32 %s42, 7
      %s47 = smul.u32 %s43, 2
      %s48 = smul.u32 %s47, 8
      %s49 = sadd.s32 %s48, %s46
      %s50 = scalar_lea.vmem [#allocation4], %s49
      %v51 = vld [vmem:[%s50] ss:$8 sm:$0x3]
      %v52 = vlaneseq
      %vm53 = vcmp.ge.s32.totalorder %v52, 0
      %vm54 = vcmp.lt.s32.totalorder %v52, 256
      %vm55 = vmand %vm53, %vm54
      %s56 = sshra.s32 %s36, 3
      %s57 = sand.u32 %s36, 7
      %s58 = sshra.s32 %s36, 3
      %s59 = sand.u32 %s36, 7
      %s60 = smul.u32 %s56, 2
      %s61 = smul.u32 %s60, 8
      %s62 = sadd.s32 %s61, %s59
      %s63 = scalar_lea.vmem [#allocation7], %s62
      %64 = vst.msk [vmem:[%s63] ss:$8 sm:$0x3] %vm55, %v51
      %65 = vst.msk [vmem:[%s63] ss:$8 sm:$0x0] %vm55, %v51
    $region14: #{tpu_custom_call.1} parent=1 // loop_footer
      %s40 = sadd.s32 1, %s36
    $region15: #{tpu_custom_call.1} parent=1 // loop_footer_branch
      %35 = sbr.rel target = $region11
    $region16: #{tpu_custom_call.1} parent=1 // loop_exit
      _
    // Predicated region
    $region17: #{tpu_custom_call.1} parent=1 // pred_check
      _
    $region18: #{tpu_custom_call.1} parent=1 // pred_check_branch
      %67 = sbr.rel (0) target = $region20
    $region19: #{tpu_custom_call.1} parent=1 // pred_region
      %69 = vsyncadd [#allocation6], 0
      %s70 = sshll.u32 [#allocation7], 4
      %s71 = int_to_ptr.vmem [resolvable:$true] %s70
      %s72 = sshll.u32 %s2, 4
      %s73 = int_to_ptr.hbm [resolvable:$true] %s72
      %78 = dma.vmem_to_hbm [thread:$0]  %s71, 2560, %s73, [#allocation6], 256, 256, 16
    $region20: #{tpu_custom_call.1} parent=1 // pred_fallthru
      _
    // Predicated region
    $region21: #{tpu_custom_call.1} parent=1 // pred_check
      _
    $region22: #{tpu_custom_call.1} parent=1 // pred_check_branch
      %80 = sbr.rel (0) target = $region24
    $region23: #{tpu_custom_call.1} parent=1 // pred_region
      %82 = dma.done [#allocation6], 2560
    $region24: #{tpu_custom_call.1} parent=1 // pred_fallthru
      _
    %83 = vsyncpa [#allocation5], 1
    %84 = vsyncpa [#allocation6], 1

</llo_original>
